<compile_context>
chip_gen: v7x
topology: tpu7x:2x2x1
jax: 0.10.0
libtpu: 0.0.40
codegen_flags: <defaults>
</compile_context>

<pallas_src>
import jax
import jax.numpy as jnp
from jax.experimental import pallas as pl
from jax.experimental.pallas import tpu as pltpu


def _bow_fused_kernel(g_ref, b_ref, out_ref):
    # g_ref  : (C, S, TN) bf16 -- mask-weighted projected rows; batch on lanes.
    # b_ref  : (C, 1)     f32  -- bias, broadcast over the lane (batch) axis.
    # out_ref: (C, TN)    f32  -- sigmoid probabilities for this batch tile.
    g = g_ref[...].astype(jnp.float32)              # upcast; accumulate in f32
    logits = jnp.sum(g, axis=1) + b_ref[...]        # reduce over S -> (C, TN)
    out_ref[...] = 1.0 / (1.0 + jnp.exp(-logits))   # sigmoid (EUP exp + div)


def _pick_batch_tile(n, c, s, *, stream_itembytes=2,
                     vmem_budget_bytes=12 * 1024 * 1024):
    """Batch tile TN for the lane axis of the (C, S, N) stream.

    Constraints: TN must be a multiple of 128 or the full batch (lane rule);
    double-buffered blocks (incl. sublane padding of S and of the C->8 padded
    output block) must fit a conservative VMEM budget that is safe under
    v5e's 16 MiB scoped default; when the batch is large enough, keep >= 2
    grid steps so the "parallel" axis can shard across v7x's two TensorCores.
    """
    if n <= 128:
        return n                                  # single full-batch block
    s_pad = -(-s // 8) * 8                        # sublane padding of (S, TN)
    c_out = -(-c // 8) * 8                        # output block pads C -> 8
    def fits(tn):
        blk = c * s_pad * tn * stream_itembytes + c_out * tn * 4
        return 2 * blk <= vmem_budget_bytes       # double buffered
    tn = 128
    for cand in (256, 512, 1024):
        if cand <= n and fits(cand):
            tn = cand
    while tn > 128 and pl.cdiv(n, tn) < 2:        # keep >=2 steps (v7x megacore)
        tn //= 2
    return tn


def precompute_projection(embeddings, w, seq_len):
    """P^T = (W @ E^T) / S, shape (C, V), f32.

    Reads the whole embedding table; recompute once per weight update and
    reuse across forward calls rather than per call.
    """
    return (w.astype(jnp.float32) @ embeddings.astype(jnp.float32).T) * (
        1.0 / float(seq_len))


def bow_mean_classifier(token_ids, mask, embeddings, w, b, *, batch_tile=None):
    """Forward pass of the BOW-mean classifier (eval mode).

    token_ids : (N, S) int32
    mask      : (N, S) float (1 for real tokens, 0 for pad)
    embeddings: (V, D) float32
    w         : (C, D) float32  (torch nn.Linear weight layout)
    b         : (C,)   float32
    returns   : (N, C) float32 sigmoid probabilities

    If given, batch_tile must be a multiple of 128 or >= N.
    """
    n, s = token_ids.shape
    c = w.shape[0]

    proj_t = precompute_projection(embeddings, w, s)              # (C, V) f32

    # ---- glue (plain JAX; fuses into one gather pass under jit) ------------
    # Gather class-width columns straight into (C, S, N): batch on the lane
    # axis, no separate transpose pass.  Fold the float mask in f32 (exact for
    # arbitrary masks), then store the stream as bf16 (2 B/elem HBM traffic).
    g = jnp.take(proj_t, token_ids.T, axis=1)                     # (C, S, N)
    g = g * mask.T.astype(jnp.float32)[None, :, :]
    g = g.astype(jnp.bfloat16)
    b2 = b.reshape(c, 1).astype(jnp.float32)

    tn = batch_tile if batch_tile is not None else _pick_batch_tile(n, c, s)
    grid = (pl.cdiv(n, tn),)

    out_cn = pl.pallas_call(
        _bow_fused_kernel,
        out_shape=jax.ShapeDtypeStruct((c, n), jnp.float32),
        grid=grid,
        in_specs=[
            pl.BlockSpec((c, s, tn), lambda i: (0, 0, i)),   # projected stream
            pl.BlockSpec((c, 1), lambda i: (0, 0)),          # bias (resident)
        ],
        out_specs=pl.BlockSpec((c, tn), lambda i: (0, i)),
        compiler_params=pltpu.CompilerParams(
            dimension_semantics=("parallel",)),
    )(g, b2)
    return out_cn.T                                               # (N, C)


def _reference(token_ids, mask, embeddings, w, b):
    # Original (unfused) module math, eval mode, f32 throughout.
    embedded = jnp.take(embeddings, token_ids, axis=0)            # (N, S, D)
    embedded = embedded * mask[..., None]
    avg = embedded.mean(axis=1)                                   # /S, like torch
    return jax.nn.sigmoid(avg @ w.T + b)


if __name__ == "__main__":
    key = jax.random.PRNGKey(0)
    k_emb, k_w, k_b, k_ids = jax.random.split(key, 4)

    # Small shapes consistent with the module.
    VOCAB, DIM = 16, 32          # embeddings: (V, D)
    CLASSES = 4
    PAD_IDX = 0
    S = 8                        # sequence length

    embeddings = jax.random.normal(k_emb, (VOCAB, DIM), dtype=jnp.float32)
    w = jax.random.normal(k_w, (CLASSES, DIM), dtype=jnp.float32) * 0.1
    b = jax.random.normal(k_b, (CLASSES,), dtype=jnp.float32) * 0.1

    fwd = jax.jit(bow_mean_classifier)

    ok = True
    # Case 1: tiny batch -> single full-batch block (grid = 1).
    # Case 2: batch 256 -> auto tile 128, two "parallel" grid steps,
    #         lane-dense 128-wide input/output blocks.
    for N in (16, 256):
        k_ids_n = jax.random.fold_in(k_ids, N)
        token_ids = jax.random.randint(k_ids_n, (N, S), 0, VOCAB, dtype=jnp.int32)
        mask = (token_ids != PAD_IDX).astype(jnp.float32)

        out = fwd(token_ids, mask, embeddings, w, b)
        out = jax.block_until_ready(out)

        ref = _reference(token_ids, mask, embeddings, w, b)
        assert out.shape == (N, CLASSES)
        # bf16 storage on the streamed operand -> loosened tolerance.
        ok = ok and bool(jnp.allclose(out, ref, atol=5e-3, rtol=5e-3))

    assert ok, "kernel output does not match reference"
    print("KERNEL_OK")
</pallas_src>

<mosaic_0001>
module attributes {stable_mosaic.version = 11 : i64} {
  func.func @_bow_fused_kernel(%arg0: i32, %arg1: memref<4x8x16xbf16, #tpu.memory_space<vmem>>, %arg2: memref<4x1xf32, #tpu.memory_space<vmem>>, %arg3: memref<4x16xf32, #tpu.memory_space<vmem>>) attributes {dimension_semantics = [#tpu.dimension_semantics<parallel>], iteration_bounds = array<i64: 1>, scalar_prefetch = 0 : i64, scratch_operands = 0 : i64, tpu.core_type = #tpu.core_type<tc>, window_params = [{transform_indices = @transform_0, window_bounds = array<i64: 4, 8, 16>}, {pipeline_mode = #tpu.pipeline_mode<synchronous>, transform_indices = @transform_1, window_bounds = array<i64: 4, 1>}, {transform_indices = @transform_2, window_bounds = array<i64: 4, 16>}]} {
    %c0 = arith.constant 0 : index
    %c0_0 = arith.constant 0 : index
    %c0_1 = arith.constant 0 : index
    %0 = vector.load %arg1[%c0, %c0_0, %c0_1] : memref<4x8x16xbf16, #tpu.memory_space<vmem>>, vector<4x8x16xbf16>
    %1 = arith.extf %0 : vector<4x8x16xbf16> to vector<4x8x16xf32>
    %cst = arith.constant dense<0.000000e+00> : vector<4x16xf32>
    %2 = vector.multi_reduction <add>, %1, %cst [1] : vector<4x8x16xf32> to vector<4x16xf32>
    %c0_2 = arith.constant 0 : index
    %c0_3 = arith.constant 0 : index
    %3 = vector.load %arg2[%c0_2, %c0_3] : memref<4x1xf32, #tpu.memory_space<vmem>>, vector<4x1xf32>
    %4 = vector.broadcast %3 : vector<4x1xf32> to vector<4x16xf32>
    %5 = arith.addf %2, %4 : vector<4x16xf32>
    %cst_4 = arith.constant 0.000000e+00 : f32
    %6 = vector.broadcast %cst_4 : f32 to vector<4x16xf32>
    %7 = arith.subf %6, %5 : vector<4x16xf32>
    %8 = math.exp %7 : vector<4x16xf32>
    %cst_5 = arith.constant 1.000000e+00 : f32
    %9 = vector.broadcast %cst_5 : f32 to vector<4x16xf32>
    %10 = arith.addf %9, %8 : vector<4x16xf32>
    %cst_6 = arith.constant 1.000000e+00 : f32
    %11 = vector.broadcast %cst_6 : f32 to vector<4x16xf32>
    %12 = arith.divf %11, %10 : vector<4x16xf32>
    %c0_7 = arith.constant 0 : index
    %c0_8 = arith.constant 0 : index
    %13 = vector.load %arg3[%c0_7, %c0_8] : memref<4x16xf32, #tpu.memory_space<vmem>>, vector<4x16xf32>
    tpu.vector_store %arg3[%c0_7, %c0_8], %12 {strides = array<i32>} : memref<4x16xf32, #tpu.memory_space<vmem>>, vector<4x16xf32>,
    return
  }
  func.func @transform_0(%arg0: i32) -> (i32, i32, i32) {
    %c0_i32 = arith.constant 0 : i32
    %c0_i32_0 = arith.constant 0 : i32
    %c0_i32_1 = arith.constant 0 : i32
    return %c0_i32, %c0_i32_0, %arg0 : i32, i32, i32
  }
  func.func @transform_1(%arg0: i32) -> (i32, i32) {
    %c0_i32 = arith.constant 0 : i32
    %c0_i32_0 = arith.constant 0 : i32
    %c0_i32_1 = arith.constant 0 : i32
    return %c0_i32, %c0_i32_0 : i32, i32
  }
  func.func @transform_2(%arg0: i32) -> (i32, i32) {
    %c0_i32 = arith.constant 0 : i32
    %c0_i32_0 = arith.constant 0 : i32
    return %c0_i32, %arg0 : i32, i32
  }
}

</mosaic_0001>

<llo_original>
// kernel: bow_mean_classifier.1
$region0: #{bow_mean_classifier.1}
  #allocation0 [shape = 'u32[]', space=smem, size = 0x4, offset = 0x4, fixed_abs, tag = 'smem constant byte address 0x4 - core index']
  #allocation1 [shape = 'u32[144,128]{1,0:T(1,128)}', space=vmem, size = 0x12000, scoped, tag = 'internal scratch']
  %s0 = inlined_call_operand.vmem [shape: bf16[4,8,16], index: 0, kind: input, shape index: {}]
  %s1 = inlined_call_operand.vmem [shape: f32[4,1], index: 1, kind: input, shape index: {}]
  %s2 = inlined_call_operand.hbm [shape: f32[4,16], index: 2, kind: output, shape index: {}]
  %s3 = sld [smem:[#allocation0]]
  $region18: #{bow_mean_classifier.1} parent=0
    _
  %s5 = ssub.s32 1, %s3
  %s6 = scalar_select 0, %s5, %s3
  $region1: #{bow_mean_classifier.1} parent=0
    #allocation2 [shape = 'u8[2048]{0}', space=vmem, size = 0x800, scoped, tag = 'output window, operand 0, single buffered']
    #allocation3 [shape = 's32[1]{0}', space=sflag, size = 0x4, scoped, tag = 'scoped memory for bow_mean_classifier.1']
    %7 = vsyncpa [#allocation3], 0
    // Predicated region
    $region2: #{bow_mean_classifier.1} parent=1 // pred_check
      _
    $region3: #{bow_mean_classifier.1} parent=1 // pred_check_branch
      %9 = sbr.rel (0) target = $region5
    $region4: #{bow_mean_classifier.1} parent=1 // pred_region
      _
    $region5: #{bow_mean_classifier.1} parent=1 // pred_fallthru
      _
    // Predicated region
    $region6: #{bow_mean_classifier.1} parent=1 // pred_check
      _
    $region7: #{bow_mean_classifier.1} parent=1 // pred_check_branch
      %11 = sbr.rel (0) target = $region9
    $region8: #{bow_mean_classifier.1} parent=1 // pred_region
      _
    $region9: #{bow_mean_classifier.1} parent=1 // pred_fallthru
      _
    %v12 = vld [vmem:[%s0] sm:$0xf]
    %v13 = vld [vmem:[%s0 + $0x4] sm:$0xf]
    %v14 = vld [vmem:[%s0 + $0x8] sm:$0xf]
    %v15 = vld [vmem:[%s0 + $0xc] sm:$0xf]
    %v16 = vunpack.c.l.bf16 %v12
    %v17 = vunpack.c.l.bf16 %v13
    %v18 = vunpack.c.l.bf16 %v14
    %v19 = vunpack.c.l.bf16 %v15
    %vm20 = vcmask 130048
    %v21 = vsel %vm20, %v16, 0.0
    %v22 = vrot.slane %v21, 4
    %v23 = vadd.f32 %v21, %v22
    %v24 = vrot.slane %v23, 2
    %v25 = vadd.f32 %v23, %v24
    %v26 = vrot.slane %v25, 1
    %v27 = vadd.f32 %v25, %v26
    %v28 = vsel %vm20, %v17, 0.0
    %v29 = vrot.slane %v28, 4
    %v30 = vadd.f32 %v28, %v29
    %v31 = vrot.slane %v30, 2
    %v32 = vadd.f32 %v30, %v31
    %v33 = vrot.slane %v32, 1
    %v34 = vadd.f32 %v32, %v33
    %v35 = vsel %vm20, %v18, 0.0
    %v36 = vrot.slane %v35, 4
    %v37 = vadd.f32 %v35, %v36
    %v38 = vrot.slane %v37, 2
    %v39 = vadd.f32 %v37, %v38
    %v40 = vrot.slane %v39, 1
    %v41 = vadd.f32 %v39, %v40
    %v42 = vsel %vm20, %v19, 0.0
    %v43 = vrot.slane %v42, 4
    %v44 = vadd.f32 %v42, %v43
    %v45 = vrot.slane %v44, 2
    %v46 = vadd.f32 %v44, %v45
    %v47 = vrot.slane %v46, 1
    %v48 = vadd.f32 %v46, %v47
    %v49 = vld [vmem:[%s1] sm:$0xf]
    %51 = vset.pattern.permute.xlu0 0
    %52 = vperm.xlu0 %51, %v49
    %v53 = vpop.permute.xlu0 %52
    %v54 = vrot.slane %v53, 1
    %v55 = vrot.slane %v53, 2
    %v56 = vrot.slane %v53, 3
    %v61 = vadd.f32 %v27, %v53
    %v62 = vadd.f32 %v34, %v54
    %v63 = vadd.f32 %v41, %v55
    %v64 = vadd.f32 %v48, %v56
    %v65 = vsub.f32 0.0, %v61
    %v66 = vsub.f32 0.0, %v62
    %v67 = vsub.f32 0.0, %v63
    %v68 = vsub.f32 0.0, %v64
    %v69 = vmul.f32 %v65, 1.442695
    %v70 = vpow.pop %v69
    %v71 = vmul.f32 %v66, 1.442695
    %v72 = vpow.pop %v71
    %v73 = vmul.f32 %v67, 1.442695
    %v74 = vpow.pop %v73
    %v75 = vmul.f32 %v68, 1.442695
    %v76 = vpow.pop %v75
    %v77 = vadd.f32 %v70, 1.0
    %v78 = vadd.f32 %v72, 1.0
    %v79 = vadd.f32 %v74, 1.0
    %v80 = vadd.f32 %v76, 1.0
    %v81 = vrcp.pop %v77
    %v82 = vmul.f32 1.0, %v81
    %v83 = vrcp.pop %v78
    %v84 = vmul.f32 1.0, %v83
    %v85 = vrcp.pop %v79
    %v86 = vmul.f32 1.0, %v85
    %v87 = vrcp.pop %v80
    %v88 = vmul.f32 1.0, %v87
    %v93 = vrot.slane %v84, 7
    %vm94 = vcmask 1041409
    %v95 = vsel %vm94, %v93, %v82
    %v96 = vrot.slane %v86, 6
    %vm97 = vcmask 1042434
    %v98 = vsel %vm97, %v96, %v95
    %v99 = vrot.slane %v88, 5
    %vm100 = vcmask 1043459
    %v101 = vsel %vm100, %v99, %v98
    %vm103 = vcmask 125952
    %104 = vst.msk [vmem:[#allocation2] sm:$0xf] %vm103, %v101
    // Predicated region
    $region10: #{bow_mean_classifier.1} parent=1 // pred_check
      _
    $region11: #{bow_mean_classifier.1} parent=1 // pred_check_branch
      %106 = sbr.rel (0) target = $region13
    $region12: #{bow_mean_classifier.1} parent=1 // pred_region
      %s108 = ssub.s32 64, 64
      %109 = vsyncadd [#allocation3], %s108
      %s111 = sshll.u32 [#allocation2], 4
      %s112 = int_to_ptr.vmem [resolvable:$true] %s111
      %114 = dma.vmem_to_hbm [thread:$0]  %s112, 64, %s2, [#allocation3]
    $region13: #{bow_mean_classifier.1} parent=1 // pred_fallthru
      _
    // Predicated region
    $region14: #{bow_mean_classifier.1} parent=1 // pred_check
      _
    $region15: #{bow_mean_classifier.1} parent=1 // pred_check_branch
      %116 = sbr.rel (0) target = $region17
    $region16: #{bow_mean_classifier.1} parent=1 // pred_region
      %117 = dma.done [#allocation3], 64
    $region17: #{bow_mean_classifier.1} parent=1 // pred_fallthru
      _
    %118 = vsyncpa [#allocation3], 1

</llo_original>
